<compile_context>
chip_gen: v6e
topology: v6e:2x2x1
jax: 0.10.0
libtpu: 0.0.40
codegen_flags: <defaults>
</compile_context>

<pallas_src>
import jax
import jax.numpy as jnp
from jax.experimental import pallas as pl
from jax.experimental.pallas import tpu as pltpu


_LANE = 128
_VPU_MAX_K = 16  # Cin + Cout at or below this -> VPU broadcast-MAC, no MXU.


def _attention_gate_kernel(g_ref, s_ref, w_in_ref, b_in_ref, wo_ref, bo_ref,
                           o_ref):
    """Fused attention gate on one (channels x spatial-tile) block.

    g_ref:    (1, Cin,  T)      gate tile
    s_ref:    (1, Cout, T)      skip tile
    w_in_ref: (Cout, Cin+Cout)  [Wg | Ws] fused weight
    b_in_ref: (Cout, 1)         bg + bs fused bias
    wo_ref:   (Cout, Cout), bo_ref: (Cout, 1)
    o_ref:    (1, Cout, T)
    """
    cin = g_ref.shape[1]
    cout = s_ref.shape[1]
    k = cin + cout

    if k <= _VPU_MAX_K:
        # Tiny channel counts: unrolled broadcast-multiply-accumulate on the
        # VPU.  Each term is a (Cout,1) weight column (lane broadcast) times a
        # (1,T) input row (sublane broadcast); all ops are full-lane.
        acc = None
        for c in range(cin):
            t = w_in_ref[:, c:c + 1] * g_ref[0, c:c + 1, :]
            acc = t if acc is None else acc + t
        for c in range(cout):
            t = w_in_ref[:, cin + c:cin + c + 1] * s_ref[0, c:c + 1, :]
            acc = acc + t
        h = jnp.maximum(acc + b_in_ref[...], 0.0)          # ReLU, (Cout, T)

        out = None
        for c in range(cout):
            t = wo_ref[:, c:c + 1] * h[c:c + 1, :]
            out = t if out is None else out + t
        o = out + bo_ref[...]
    else:
        # Larger channel counts: stack g/s on the sublane axis in VMEM and do
        # ONE MXU contraction with K = Cin+Cout (instead of two half-empty
        # ones), then the output conv.
        x = jnp.concatenate([g_ref[0], s_ref[0]], axis=0)  # (Cin+Cout, T)
        h = jnp.maximum(
            jnp.dot(w_in_ref[...], x, preferred_element_type=jnp.float32)
            + b_in_ref[...], 0.0)
        o = jnp.dot(wo_ref[...], h, preferred_element_type=jnp.float32) \
            + bo_ref[...]

    # sigmoid(x) = 0.5*tanh(0.5*x) + 0.5  (tanh = single EUP op, no f32 divide)
    o_ref[0] = (0.5 * jnp.tanh(0.5 * o) + 0.5).astype(o_ref.dtype)


def _round_up(x, m):
    return -(-x // m) * m


def _plan_spatial_tiles(hw, cin, cout, batch):
    """Budget-derived lane-dense spatial tiling.

    Returns (tile, n_tiles, hw_full) with tile a multiple of 128,
    hw_full = tile * n_tiles >= hw, and batch * n_tiles >= 2 whenever the
    image is big enough (keeps both v7x TensorCores busy).
    """
    hw_pad = _round_up(hw, _LANE)
    # Per spatial lane (f32): double-buffered g/s inputs + output, plus a
    # handful of in-kernel (C, T) intermediates.
    bytes_per_lane = (2 * (cin + 2 * cout) + (cin + 4 * cout)) * 4
    budget = 20 * 1024 * 1024           # stay well inside the 32 MiB scoped VMEM
    cap = max(_LANE, min(16384, (budget // bytes_per_lane) // _LANE * _LANE))
    n_tiles = max(1, pl.cdiv(hw_pad, cap))
    if batch * n_tiles < 2 and hw_pad >= 2 * _LANE:
        n_tiles = 2                     # >=2 parallel iterations for megacore
    tile = _round_up(pl.cdiv(hw_pad, n_tiles), _LANE)
    return tile, n_tiles, tile * n_tiles


def attention_block(gate_nchw, skip_nchw, params):
    """gate: (B, in_c, H, W); skip: (B, out_c, H, W). Returns (B, out_c, H, W)."""
    wg, bg = params["wg"], params["bg"]
    ws, bs = params["ws"], params["bs"]
    wo, bo = params["wo"], params["bo"]

    B, Cin, H, W = gate_nchw.shape
    Cout = wg.shape[0]
    assert skip_nchw.shape == (B, Cout, H, W)

    HW = H * W
    tile, n_tiles, hw_full = _plan_spatial_tiles(HW, Cin, Cout, B)

    # NCHW -> (B, C, H*W): contiguous reshape, no transpose; channels on the
    # sublane axis, pixels on the 128-wide lane axis.
    g = gate_nchw.reshape(B, Cin, HW).astype(jnp.float32)
    s = skip_nchw.reshape(B, Cout, HW).astype(jnp.float32)
    if hw_full != HW:
        g = jnp.pad(g, ((0, 0), (0, 0), (0, hw_full - HW)))
        s = jnp.pad(s, ((0, 0), (0, 0), (0, hw_full - HW)))

    # Fold Wg/Ws (and their biases) into a single contraction, once, host-side.
    w_in = jnp.concatenate([wg, ws], axis=1).astype(jnp.float32)  # (Cout, Cin+Cout)
    b_in = (bg + bs).astype(jnp.float32)                          # (Cout, 1)
    wo = wo.astype(jnp.float32)
    bo = bo.astype(jnp.float32)

    out = pl.pallas_call(
        _attention_gate_kernel,
        out_shape=jax.ShapeDtypeStruct((B, Cout, hw_full), jnp.float32),
        grid_spec=pltpu.PrefetchScalarGridSpec(
            num_scalar_prefetch=0,
            grid=(B, n_tiles),
            in_specs=[
                pl.BlockSpec((1, Cin, tile), lambda b, j: (b, 0, j)),
                pl.BlockSpec((1, Cout, tile), lambda b, j: (b, 0, j)),
                pl.BlockSpec((Cout, Cin + Cout), lambda b, j: (0, 0)),
                pl.BlockSpec((Cout, 1), lambda b, j: (0, 0)),
                pl.BlockSpec((Cout, Cout), lambda b, j: (0, 0)),
                pl.BlockSpec((Cout, 1), lambda b, j: (0, 0)),
            ],
            out_specs=pl.BlockSpec((1, Cout, tile), lambda b, j: (b, 0, j)),
        ),
        compiler_params=pltpu.CompilerParams(
            dimension_semantics=("parallel", "parallel"),
            vmem_limit_bytes=32 * 1024 * 1024,
        ),
    )(g, s, w_in, b_in, wo, bo)

    if hw_full != HW:
        out = out[:, :, :HW]
    return out.reshape(B, Cout, H, W)


def init_params(key, in_c, out_c):
    """Mirror PyTorch Conv2d(k=1) default init bounds (1/sqrt(fan_in))."""
    ks = jax.random.split(key, 6)
    b1 = 1.0 / in_c ** 0.5
    b2 = 1.0 / out_c ** 0.5
    return {
        "wg": jax.random.uniform(ks[0], (out_c, in_c), jnp.float32, -b1, b1),
        "bg": jax.random.uniform(ks[1], (out_c, 1), jnp.float32, -b1, b1),
        "ws": jax.random.uniform(ks[2], (out_c, out_c), jnp.float32, -b2, b2),
        "bs": jax.random.uniform(ks[3], (out_c, 1), jnp.float32, -b2, b2),
        "wo": jax.random.uniform(ks[4], (out_c, out_c), jnp.float32, -b2, b2),
        "bo": jax.random.uniform(ks[5], (out_c, 1), jnp.float32, -b2, b2),
    }


def _reference(gate, skip, params):
    """Pure-JAX reference (1x1 convs as einsums) for validation."""
    def conv1x1(x, w, b):
        return jnp.einsum("oc,bchw->bohw", w, x) + b[:, 0][None, :, None, None]

    a = conv1x1(gate, params["wg"], params["bg"])
    b = conv1x1(skip, params["ws"], params["bs"])
    h = jnp.maximum(a + b, 0.0)
    o = conv1x1(h, params["wo"], params["bo"])
    return jax.nn.sigmoid(o)


if __name__ == "__main__":
    key = jax.random.PRNGKey(0)
    kg, ks, kp = jax.random.split(key, 3)

    B, in_c, out_c, H, W = 2, 4, 8, 16, 16
    gate = jax.random.normal(kg, (B, in_c, H, W), jnp.float32)
    skip = jax.random.normal(ks, (B, out_c, H, W), jnp.float32)
    params = init_params(kp, in_c, out_c)

    out = attention_block(gate, skip, params)
    out = jax.block_until_ready(out)
    assert out.shape == (B, out_c, H, W)

    ref = _reference(gate, skip, params)
    assert jnp.allclose(out, ref, atol=1e-5, rtol=1e-5)

    print("KERNEL_OK")
</pallas_src>

<mosaic_0001>
module attributes {stable_mosaic.version = 11 : i64} {
  func.func @_attention_gate_kernel(%arg0: i32, %arg1: i32, %arg2: memref<1x4x256xf32, #tpu.memory_space<vmem>>, %arg3: memref<1x8x256xf32, #tpu.memory_space<vmem>>, %arg4: memref<8x12xf32, #tpu.memory_space<vmem>>, %arg5: memref<8x1xf32, #tpu.memory_space<vmem>>, %arg6: memref<8x8xf32, #tpu.memory_space<vmem>>, %arg7: memref<8x1xf32, #tpu.memory_space<vmem>>, %arg8: memref<1x8x256xf32, #tpu.memory_space<vmem>>) attributes {dimension_semantics = [#tpu.dimension_semantics<parallel>, #tpu.dimension_semantics<parallel>], iteration_bounds = array<i64: 2, 1>, scalar_prefetch = 0 : i64, scratch_operands = 0 : i64, tpu.core_type = #tpu.core_type<tc>, window_params = [{transform_indices = @transform_0, window_bounds = array<i64: 1, 4, 256>}, {transform_indices = @transform_1, window_bounds = array<i64: 1, 8, 256>}, {pipeline_mode = #tpu.pipeline_mode<synchronous>, transform_indices = @transform_2, window_bounds = array<i64: 8, 12>}, {pipeline_mode = #tpu.pipeline_mode<synchronous>, transform_indices = @transform_3, window_bounds = array<i64: 8, 1>}, {pipeline_mode = #tpu.pipeline_mode<synchronous>, transform_indices = @transform_4, window_bounds = array<i64: 8, 8>}, {pipeline_mode = #tpu.pipeline_mode<synchronous>, transform_indices = @transform_5, window_bounds = array<i64: 8, 1>}, {transform_indices = @transform_6, window_bounds = array<i64: 1, 8, 256>}]} {
    %c0 = arith.constant 0 : index
    %c0_0 = arith.constant 0 : index
    %0 = vector.load %arg4[%c0, %c0_0] : memref<8x12xf32, #tpu.memory_space<vmem>>, vector<8x1xf32>
    %c0_1 = arith.constant 0 : index
    %c0_2 = arith.constant 0 : index
    %c0_3 = arith.constant 0 : index
    %1 = vector.load %arg2[%c0_1, %c0_2, %c0_3] : memref<1x4x256xf32, #tpu.memory_space<vmem>>, vector<1x1x256xf32>
    %2 = vector.shape_cast %1 : vector<1x1x256xf32> to vector<1x256xf32>
    %3 = vector.broadcast %0 : vector<8x1xf32> to vector<8x256xf32>
    %4 = vector.broadcast %2 : vector<1x256xf32> to vector<8x256xf32>
    %5 = arith.mulf %3, %4 : vector<8x256xf32>
    %c0_4 = arith.constant 0 : index
    %c1 = arith.constant 1 : index
    %6 = vector.load %arg4[%c0_4, %c1] : memref<8x12xf32, #tpu.memory_space<vmem>>, vector<8x1xf32>
    %c0_5 = arith.constant 0 : index
    %c1_6 = arith.constant 1 : index
    %c0_7 = arith.constant 0 : index
    %7 = vector.load %arg2[%c0_5, %c1_6, %c0_7] : memref<1x4x256xf32, #tpu.memory_space<vmem>>, vector<1x1x256xf32>
    %8 = vector.shape_cast %7 : vector<1x1x256xf32> to vector<1x256xf32>
    %9 = vector.broadcast %6 : vector<8x1xf32> to vector<8x256xf32>
    %10 = vector.broadcast %8 : vector<1x256xf32> to vector<8x256xf32>
    %11 = arith.mulf %9, %10 : vector<8x256xf32>
    %12 = arith.addf %5, %11 : vector<8x256xf32>
    %c0_8 = arith.constant 0 : index
    %c2 = arith.constant 2 : index
    %13 = vector.load %arg4[%c0_8, %c2] : memref<8x12xf32, #tpu.memory_space<vmem>>, vector<8x1xf32>
    %c0_9 = arith.constant 0 : index
    %c2_10 = arith.constant 2 : index
    %c0_11 = arith.constant 0 : index
    %14 = vector.load %arg2[%c0_9, %c2_10, %c0_11] : memref<1x4x256xf32, #tpu.memory_space<vmem>>, vector<1x1x256xf32>
    %15 = vector.shape_cast %14 : vector<1x1x256xf32> to vector<1x256xf32>
    %16 = vector.broadcast %13 : vector<8x1xf32> to vector<8x256xf32>
    %17 = vector.broadcast %15 : vector<1x256xf32> to vector<8x256xf32>
    %18 = arith.mulf %16, %17 : vector<8x256xf32>
    %19 = arith.addf %12, %18 : vector<8x256xf32>
    %c0_12 = arith.constant 0 : index
    %c3 = arith.constant 3 : index
    %20 = vector.load %arg4[%c0_12, %c3] : memref<8x12xf32, #tpu.memory_space<vmem>>, vector<8x1xf32>
    %c0_13 = arith.constant 0 : index
    %c3_14 = arith.constant 3 : index
    %c0_15 = arith.constant 0 : index
    %21 = vector.load %arg2[%c0_13, %c3_14, %c0_15] : memref<1x4x256xf32, #tpu.memory_space<vmem>>, vector<1x1x256xf32>
    %22 = vector.shape_cast %21 : vector<1x1x256xf32> to vector<1x256xf32>
    %23 = vector.broadcast %20 : vector<8x1xf32> to vector<8x256xf32>
    %24 = vector.broadcast %22 : vector<1x256xf32> to vector<8x256xf32>
    %25 = arith.mulf %23, %24 : vector<8x256xf32>
    %26 = arith.addf %19, %25 : vector<8x256xf32>
    %c0_16 = arith.constant 0 : index
    %c4 = arith.constant 4 : index
    %27 = vector.load %arg4[%c0_16, %c4] : memref<8x12xf32, #tpu.memory_space<vmem>>, vector<8x1xf32>
    %c0_17 = arith.constant 0 : index
    %c0_18 = arith.constant 0 : index
    %c0_19 = arith.constant 0 : index
    %28 = vector.load %arg3[%c0_17, %c0_18, %c0_19] : memref<1x8x256xf32, #tpu.memory_space<vmem>>, vector<1x1x256xf32>
    %29 = vector.shape_cast %28 : vector<1x1x256xf32> to vector<1x256xf32>
    %30 = vector.broadcast %27 : vector<8x1xf32> to vector<8x256xf32>
    %31 = vector.broadcast %29 : vector<1x256xf32> to vector<8x256xf32>
    %32 = arith.mulf %30, %31 : vector<8x256xf32>
    %33 = arith.addf %26, %32 : vector<8x256xf32>
    %c0_20 = arith.constant 0 : index
    %c5 = arith.constant 5 : index
    %34 = vector.load %arg4[%c0_20, %c5] : memref<8x12xf32, #tpu.memory_space<vmem>>, vector<8x1xf32>
    %c0_21 = arith.constant 0 : index
    %c1_22 = arith.constant 1 : index
    %c0_23 = arith.constant 0 : index
    %35 = vector.load %arg3[%c0_21, %c1_22, %c0_23] : memref<1x8x256xf32, #tpu.memory_space<vmem>>, vector<1x1x256xf32>
    %36 = vector.shape_cast %35 : vector<1x1x256xf32> to vector<1x256xf32>
    %37 = vector.broadcast %34 : vector<8x1xf32> to vector<8x256xf32>
    %38 = vector.broadcast %36 : vector<1x256xf32> to vector<8x256xf32>
    %39 = arith.mulf %37, %38 : vector<8x256xf32>
    %40 = arith.addf %33, %39 : vector<8x256xf32>
    %c0_24 = arith.constant 0 : index
    %c6 = arith.constant 6 : index
    %41 = vector.load %arg4[%c0_24, %c6] : memref<8x12xf32, #tpu.memory_space<vmem>>, vector<8x1xf32>
    %c0_25 = arith.constant 0 : index
    %c2_26 = arith.constant 2 : index
    %c0_27 = arith.constant 0 : index
    %42 = vector.load %arg3[%c0_25, %c2_26, %c0_27] : memref<1x8x256xf32, #tpu.memory_space<vmem>>, vector<1x1x256xf32>
    %43 = vector.shape_cast %42 : vector<1x1x256xf32> to vector<1x256xf32>
    %44 = vector.broadcast %41 : vector<8x1xf32> to vector<8x256xf32>
    %45 = vector.broadcast %43 : vector<1x256xf32> to vector<8x256xf32>
    %46 = arith.mulf %44, %45 : vector<8x256xf32>
    %47 = arith.addf %40, %46 : vector<8x256xf32>
    %c0_28 = arith.constant 0 : index
    %c7 = arith.constant 7 : index
    %48 = vector.load %arg4[%c0_28, %c7] : memref<8x12xf32, #tpu.memory_space<vmem>>, vector<8x1xf32>
    %c0_29 = arith.constant 0 : index
    %c3_30 = arith.constant 3 : index
    %c0_31 = arith.constant 0 : index
    %49 = vector.load %arg3[%c0_29, %c3_30, %c0_31] : memref<1x8x256xf32, #tpu.memory_space<vmem>>, vector<1x1x256xf32>
    %50 = vector.shape_cast %49 : vector<1x1x256xf32> to vector<1x256xf32>
    %51 = vector.broadcast %48 : vector<8x1xf32> to vector<8x256xf32>
    %52 = vector.broadcast %50 : vector<1x256xf32> to vector<8x256xf32>
    %53 = arith.mulf %51, %52 : vector<8x256xf32>
    %54 = arith.addf %47, %53 : vector<8x256xf32>
    %c0_32 = arith.constant 0 : index
    %c8 = arith.constant 8 : index
    %55 = vector.load %arg4[%c0_32, %c8] : memref<8x12xf32, #tpu.memory_space<vmem>>, vector<8x1xf32>
    %c0_33 = arith.constant 0 : index
    %c4_34 = arith.constant 4 : index
    %c0_35 = arith.constant 0 : index
    %56 = vector.load %arg3[%c0_33, %c4_34, %c0_35] : memref<1x8x256xf32, #tpu.memory_space<vmem>>, vector<1x1x256xf32>
    %57 = vector.shape_cast %56 : vector<1x1x256xf32> to vector<1x256xf32>
    %58 = vector.broadcast %55 : vector<8x1xf32> to vector<8x256xf32>
    %59 = vector.broadcast %57 : vector<1x256xf32> to vector<8x256xf32>
    %60 = arith.mulf %58, %59 : vector<8x256xf32>
    %61 = arith.addf %54, %60 : vector<8x256xf32>
    %c0_36 = arith.constant 0 : index
    %c9 = arith.constant 9 : index
    %62 = vector.load %arg4[%c0_36, %c9] : memref<8x12xf32, #tpu.memory_space<vmem>>, vector<8x1xf32>
    %c0_37 = arith.constant 0 : index
    %c5_38 = arith.constant 5 : index
    %c0_39 = arith.constant 0 : index
    %63 = vector.load %arg3[%c0_37, %c5_38, %c0_39] : memref<1x8x256xf32, #tpu.memory_space<vmem>>, vector<1x1x256xf32>
    %64 = vector.shape_cast %63 : vector<1x1x256xf32> to vector<1x256xf32>
    %65 = vector.broadcast %62 : vector<8x1xf32> to vector<8x256xf32>
    %66 = vector.broadcast %64 : vector<1x256xf32> to vector<8x256xf32>
    %67 = arith.mulf %65, %66 : vector<8x256xf32>
    %68 = arith.addf %61, %67 : vector<8x256xf32>
    %c0_40 = arith.constant 0 : index
    %c10 = arith.constant 10 : index
    %69 = vector.load %arg4[%c0_40, %c10] : memref<8x12xf32, #tpu.memory_space<vmem>>, vector<8x1xf32>
    %c0_41 = arith.constant 0 : index
    %c6_42 = arith.constant 6 : index
    %c0_43 = arith.constant 0 : index
    %70 = vector.load %arg3[%c0_41, %c6_42, %c0_43] : memref<1x8x256xf32, #tpu.memory_space<vmem>>, vector<1x1x256xf32>
    %71 = vector.shape_cast %70 : vector<1x1x256xf32> to vector<1x256xf32>
    %72 = vector.broadcast %69 : vector<8x1xf32> to vector<8x256xf32>
    %73 = vector.broadcast %71 : vector<1x256xf32> to vector<8x256xf32>
    %74 = arith.mulf %72, %73 : vector<8x256xf32>
    %75 = arith.addf %68, %74 : vector<8x256xf32>
    %c0_44 = arith.constant 0 : index
    %c11 = arith.constant 11 : index
    %76 = vector.load %arg4[%c0_44, %c11] : memref<8x12xf32, #tpu.memory_space<vmem>>, vector<8x1xf32>
    %c0_45 = arith.constant 0 : index
    %c7_46 = arith.constant 7 : index
    %c0_47 = arith.constant 0 : index
    %77 = vector.load %arg3[%c0_45, %c7_46, %c0_47] : memref<1x8x256xf32, #tpu.memory_space<vmem>>, vector<1x1x256xf32>
    %78 = vector.shape_cast %77 : vector<1x1x256xf32> to vector<1x256xf32>
    %79 = vector.broadcast %76 : vector<8x1xf32> to vector<8x256xf32>
    %80 = vector.broadcast %78 : vector<1x256xf32> to vector<8x256xf32>
    %81 = arith.mulf %79, %80 : vector<8x256xf32>
    %82 = arith.addf %75, %81 : vector<8x256xf32>
    %c0_48 = arith.constant 0 : index
    %c0_49 = arith.constant 0 : index
    %83 = vector.load %arg5[%c0_48, %c0_49] : memref<8x1xf32, #tpu.memory_space<vmem>>, vector<8x1xf32>
    %84 = vector.broadcast %83 : vector<8x1xf32> to vector<8x256xf32>
    %85 = arith.addf %82, %84 : vector<8x256xf32>
    %cst = arith.constant 0.000000e+00 : f32
    %86 = vector.broadcast %cst : f32 to vector<8x256xf32>
    %87 = arith.maximumf %85, %86 : vector<8x256xf32>
    %c0_50 = arith.constant 0 : index
    %c0_51 = arith.constant 0 : index
    %88 = vector.load %arg6[%c0_50, %c0_51] : memref<8x8xf32, #tpu.memory_space<vmem>>, vector<8x1xf32>
    %89 = vector.extract_strided_slice %87 {offsets = [0, 0], sizes = [1, 256], strides = [1, 1]} : vector<8x256xf32> to vector<1x256xf32>
    %90 = vector.broadcast %88 : vector<8x1xf32> to vector<8x256xf32>
    %91 = vector.broadcast %89 : vector<1x256xf32> to vector<8x256xf32>
    %92 = arith.mulf %90, %91 : vector<8x256xf32>
    %c0_52 = arith.constant 0 : index
    %c1_53 = arith.constant 1 : index
    %93 = vector.load %arg6[%c0_52, %c1_53] : memref<8x8xf32, #tpu.memory_space<vmem>>, vector<8x1xf32>
    %94 = vector.extract_strided_slice %87 {offsets = [1, 0], sizes = [1, 256], strides = [1, 1]} : vector<8x256xf32> to vector<1x256xf32>
    %95 = vector.broadcast %93 : vector<8x1xf32> to vector<8x256xf32>
    %96 = vector.broadcast %94 : vector<1x256xf32> to vector<8x256xf32>
    %97 = arith.mulf %95, %96 : vector<8x256xf32>
    %98 = arith.addf %92, %97 : vector<8x256xf32>
    %c0_54 = arith.constant 0 : index
    %c2_55 = arith.constant 2 : index
    %99 = vector.load %arg6[%c0_54, %c2_55] : memref<8x8xf32, #tpu.memory_space<vmem>>, vector<8x1xf32>
    %100 = vector.extract_strided_slice %87 {offsets = [2, 0], sizes = [1, 256], strides = [1, 1]} : vector<8x256xf32> to vector<1x256xf32>
    %101 = vector.broadcast %99 : vector<8x1xf32> to vector<8x256xf32>
    %102 = vector.broadcast %100 : vector<1x256xf32> to vector<8x256xf32>
    %103 = arith.mulf %101, %102 : vector<8x256xf32>
    %104 = arith.addf %98, %103 : vector<8x256xf32>
    %c0_56 = arith.constant 0 : index
    %c3_57 = arith.constant 3 : index
    %105 = vector.load %arg6[%c0_56, %c3_57] : memref<8x8xf32, #tpu.memory_space<vmem>>, vector<8x1xf32>
    %106 = vector.extract_strided_slice %87 {offsets = [3, 0], sizes = [1, 256], strides = [1, 1]} : vector<8x256xf32> to vector<1x256xf32>
    %107 = vector.broadcast %105 : vector<8x1xf32> to vector<8x256xf32>
    %108 = vector.broadcast %106 : vector<1x256xf32> to vector<8x256xf32>
    %109 = arith.mulf %107, %108 : vector<8x256xf32>
    %110 = arith.addf %104, %109 : vector<8x256xf32>
    %c0_58 = arith.constant 0 : index
    %c4_59 = arith.constant 4 : index
    %111 = vector.load %arg6[%c0_58, %c4_59] : memref<8x8xf32, #tpu.memory_space<vmem>>, vector<8x1xf32>
    %112 = vector.extract_strided_slice %87 {offsets = [4, 0], sizes = [1, 256], strides = [1, 1]} : vector<8x256xf32> to vector<1x256xf32>
    %113 = vector.broadcast %111 : vector<8x1xf32> to vector<8x256xf32>
    %114 = vector.broadcast %112 : vector<1x256xf32> to vector<8x256xf32>
    %115 = arith.mulf %113, %114 : vector<8x256xf32>
    %116 = arith.addf %110, %115 : vector<8x256xf32>
    %c0_60 = arith.constant 0 : index
    %c5_61 = arith.constant 5 : index
    %117 = vector.load %arg6[%c0_60, %c5_61] : memref<8x8xf32, #tpu.memory_space<vmem>>, vector<8x1xf32>
    %118 = vector.extract_strided_slice %87 {offsets = [5, 0], sizes = [1, 256], strides = [1, 1]} : vector<8x256xf32> to vector<1x256xf32>
    %119 = vector.broadcast %117 : vector<8x1xf32> to vector<8x256xf32>
    %120 = vector.broadcast %118 : vector<1x256xf32> to vector<8x256xf32>
    %121 = arith.mulf %119, %120 : vector<8x256xf32>
    %122 = arith.addf %116, %121 : vector<8x256xf32>
    %c0_62 = arith.constant 0 : index
    %c6_63 = arith.constant 6 : index
    %123 = vector.load %arg6[%c0_62, %c6_63] : memref<8x8xf32, #tpu.memory_space<vmem>>, vector<8x1xf32>
    %124 = vector.extract_strided_slice %87 {offsets = [6, 0], sizes = [1, 256], strides = [1, 1]} : vector<8x256xf32> to vector<1x256xf32>
    %125 = vector.broadcast %123 : vector<8x1xf32> to vector<8x256xf32>
    %126 = vector.broadcast %124 : vector<1x256xf32> to vector<8x256xf32>
    %127 = arith.mulf %125, %126 : vector<8x256xf32>
    %128 = arith.addf %122, %127 : vector<8x256xf32>
    %c0_64 = arith.constant 0 : index
    %c7_65 = arith.constant 7 : index
    %129 = vector.load %arg6[%c0_64, %c7_65] : memref<8x8xf32, #tpu.memory_space<vmem>>, vector<8x1xf32>
    %130 = vector.extract_strided_slice %87 {offsets = [7, 0], sizes = [1, 256], strides = [1, 1]} : vector<8x256xf32> to vector<1x256xf32>
    %131 = vector.broadcast %129 : vector<8x1xf32> to vector<8x256xf32>
    %132 = vector.broadcast %130 : vector<1x256xf32> to vector<8x256xf32>
    %133 = arith.mulf %131, %132 : vector<8x256xf32>
    %134 = arith.addf %128, %133 : vector<8x256xf32>
    %c0_66 = arith.constant 0 : index
    %c0_67 = arith.constant 0 : index
    %135 = vector.load %arg7[%c0_66, %c0_67] : memref<8x1xf32, #tpu.memory_space<vmem>>, vector<8x1xf32>
    %136 = vector.broadcast %135 : vector<8x1xf32> to vector<8x256xf32>
    %137 = arith.addf %134, %136 : vector<8x256xf32>
    %cst_68 = arith.constant 5.000000e-01 : f32
    %138 = vector.broadcast %cst_68 : f32 to vector<8x256xf32>
    %139 = arith.mulf %138, %137 : vector<8x256xf32>
    %140 = math.tanh %139 : vector<8x256xf32>
    %cst_69 = arith.constant 5.000000e-01 : f32
    %141 = vector.broadcast %cst_69 : f32 to vector<8x256xf32>
    %142 = arith.mulf %141, %140 : vector<8x256xf32>
    %cst_70 = arith.constant 5.000000e-01 : f32
    %143 = vector.broadcast %cst_70 : f32 to vector<8x256xf32>
    %144 = arith.addf %142, %143 : vector<8x256xf32>
    %c0_71 = arith.constant 0 : index
    %c0_72 = arith.constant 0 : index
    %c0_73 = arith.constant 0 : index
    %145 = vector.load %arg8[%c0_71, %c0_72, %c0_73] : memref<1x8x256xf32, #tpu.memory_space<vmem>>, vector<1x8x256xf32>
    %146 = vector.shape_cast %145 : vector<1x8x256xf32> to vector<8x256xf32>
    %147 = vector.shape_cast %144 : vector<8x256xf32> to vector<1x8x256xf32>
    tpu.vector_store %arg8[%c0_71, %c0_72, %c0_73], %147 {strides = array<i32>} : memref<1x8x256xf32, #tpu.memory_space<vmem>>, vector<1x8x256xf32>,
    return
  }
  func.func @transform_0(%arg0: i32, %arg1: i32) -> (i32, i32, i32) {
    %c0_i32 = arith.constant 0 : i32
    %c0_i32_0 = arith.constant 0 : i32
    return %arg0, %c0_i32, %arg1 : i32, i32, i32
  }
  func.func @transform_1(%arg0: i32, %arg1: i32) -> (i32, i32, i32) {
    %c0_i32 = arith.constant 0 : i32
    %c0_i32_0 = arith.constant 0 : i32
    return %arg0, %c0_i32, %arg1 : i32, i32, i32
  }
  func.func @transform_2(%arg0: i32, %arg1: i32) -> (i32, i32) {
    %c0_i32 = arith.constant 0 : i32
    %c0_i32_0 = arith.constant 0 : i32
    %c0_i32_1 = arith.constant 0 : i32
    return %c0_i32, %c0_i32_0 : i32, i32
  }
  func.func @transform_3(%arg0: i32, %arg1: i32) -> (i32, i32) {
    %c0_i32 = arith.constant 0 : i32
    %c0_i32_0 = arith.constant 0 : i32
    %c0_i32_1 = arith.constant 0 : i32
    return %c0_i32, %c0_i32_0 : i32, i32
  }
  func.func @transform_4(%arg0: i32, %arg1: i32) -> (i32, i32) {
    %c0_i32 = arith.constant 0 : i32
    %c0_i32_0 = arith.constant 0 : i32
    %c0_i32_1 = arith.constant 0 : i32
    return %c0_i32, %c0_i32_0 : i32, i32
  }
  func.func @transform_5(%arg0: i32, %arg1: i32) -> (i32, i32) {
    %c0_i32 = arith.constant 0 : i32
    %c0_i32_0 = arith.constant 0 : i32
    %c0_i32_1 = arith.constant 0 : i32
    return %c0_i32, %c0_i32_0 : i32, i32
  }
  func.func @transform_6(%arg0: i32, %arg1: i32) -> (i32, i32, i32) {
    %c0_i32 = arith.constant 0 : i32
    %c0_i32_0 = arith.constant 0 : i32
    return %arg0, %c0_i32, %arg1 : i32, i32, i32
  }
}

</mosaic_0001>

<llo_original>
// kernel: tpu_custom_call.1
$region0: #{tpu_custom_call.1}
  #allocation0 [shape = 'u32[]', space=smem, size = 0x4, offset = 0x4, fixed_abs, tag = 'smem constant byte address 0x4 - core index']
  #allocation1 [shape = 'u32[144,128]{1,0:T(1,128)}', space=vmem, size = 0x12000, scoped, tag = 'internal scratch']
  %s0 = inlined_call_operand.vmem [shape: f32[2,4,256], index: 0, kind: input, shape index: {}]
  %s1 = inlined_call_operand.hbm [shape: f32[2,8,256], index: 1, kind: input, shape index: {}]
  %s2 = inlined_call_operand.hbm [shape: f32[8,12], index: 2, kind: input, shape index: {}]
  %s3 = inlined_call_operand.vmem [shape: f32[8,1], index: 3, kind: input, shape index: {}]
  %s4 = inlined_call_operand.vmem [shape: f32[8,8], index: 4, kind: input, shape index: {}]
  %s5 = inlined_call_operand.vmem [shape: f32[8,1], index: 5, kind: input, shape index: {}]
  %s6 = inlined_call_operand.hbm [shape: f32[2,8,256], index: 6, kind: output, shape index: {}]
  %s7 = sld [smem:[#allocation0]]
  $region65: #{tpu_custom_call.1} parent=0
    _
  %s9 = ssub.s32 1, %s7
  %s10 = scalar_select 0, %s9, %s7
  $region1: #{tpu_custom_call.1} parent=0
    #allocation2 [shape = 'u8[16384]{0}', space=vmem, size = 0x4000, scoped, tag = 'input window, operand 1']
    #allocation3 [shape = 's32[2]{0}', space=sflag, size = 0x8, scoped, tag = 'scoped memory for tpu_custom_call.1']
    #allocation4 [shape = 's32[2]{0}', space=sflag, size = 0x8, scoped, tag = 'scoped memory for tpu_custom_call.1']
    #allocation5 [shape = 'u8[4096]{0}', space=vmem, size = 0x1000, scoped, tag = 'input window, operand 2, single buffered']
    #allocation6 [shape = 's32[1]{0}', space=sflag, size = 0x4, scoped, tag = 'scoped memory for tpu_custom_call.1']
    #allocation7 [shape = 'u8[16384]{0}', space=vmem, size = 0x4000, scoped, tag = 'output window, operand 0']
    %11 = vsyncpa [#allocation3], 0
    %s12 = scalar_lea.sflag [#allocation3], 1
    %13 = vsyncpa %s12, 0
    %14 = vsyncpa [#allocation6], 0
    %15 = vsyncpa [#allocation4], 0
    %s16 = scalar_lea.sflag [#allocation4], 1
    %17 = vsyncpa %s16, 0
    loop: start=0, step=1, limit=4
    $region2: #{tpu_custom_call.1} parent=1 // loop_pre_header
      _
    $region3: #{tpu_custom_call.1} parent=1 // loop_header
      %s19 = sphi 0, %s23
      %p20 = scmp.ge.s32.totalorder %s19, 4
      %s26 = sphi 0, %s38
      %s27 = sphi 0, %s34
      %s28 = sphi 0, %s26
      %s29 = sphi 0, %s27
      %s30 = sphi 0, %s28
      %s31 = sphi 0, %s29
      %s43 = sphi 0, %s45
      %s46 = sphi 0, %s43
      %s47 = sphi 0, %s46
      %s63 = sphi 0, %s47
      %s71 = sphi 0, %s73
      %s74 = sphi 0, %s71
      %s75 = sphi 0, %s74
      %s91 = sphi 0, %s75
      %s95 = sphi 0, %s95
      %s97 = sphi 0, %s95
      %s98 = sphi 0, %s97
      %s112 = sphi 0, %s98
      %s116 = sphi 0, %s116
      %s118 = sphi 0, %s116
      %s119 = sphi 0, %s118
      %s133 = sphi 0, %s119
      %s137 = sphi 0, %s137
      %s139 = sphi 0, %s137
      %s140 = sphi 0, %s139
      %s154 = sphi 0, %s140
      %s158 = sphi 0, %s158
      %s160 = sphi 0, %s158
      %s161 = sphi 0, %s160
      %s175 = sphi 0, %s161
      %s183 = sphi 0, %s185
      %s186 = sphi 0, %s183
      %s187 = sphi 0, %s186
      %s203 = sphi 0, %s187
    $region4: #{tpu_custom_call.1} parent=1 // loop_header_branch
      %22 = sbr.rel (%p20) target = $region8
    $region5: #{tpu_custom_call.1} parent=1 // loop_body
      %s24 = ssub.s32 %s19, 1
      %s25 = ssub.s32 %s19, 2
      %s32 = sadd.s32 1, %s27
      %p33 = scmp.ge.s32.totalorder %s32, 1
      %s34 = scalar_select %p33, 0, %s32
      %s35 = sadd.s32 1, %s26
      %s36 = scalar_select %p33, %s35, %s26
      %p37 = scmp.ge.s32.totalorder %s36, 2
      %s38 = scalar_select %p37, 0, %s36
      %s39 = ssub.s32 %s26, %s38
      %s40 = ssub.s32 %s27, %s34
      %s41 = sor.u32 %s39, %s40
      %p42 = scmp.eq.s32.totalorder %s41, 0
      %s44 = sadd.s32 %s43, 1
      %s45 = scalar_select %p42, %s43, %s44
      %p48 = pneg %p42
      %p49 = scmp.eq.s32.totalorder %s19, 1
      %p50 = por %p48, %p49
      %p51 = scmp.ne.s32.totalorder %s43, %s46
      %p52 = scmp.eq.s32.totalorder %s19, 0
      %p53 = por %p51, %p52
      %p54 = scmp.ne.s32.totalorder %s43, %s46
      %p55 = scmp.eq.s32.totalorder %s24, 1
      %p56 = por %p54, %p55
      %p57 = scmp.ne.s32.totalorder %s46, %s47
      %p58 = scmp.eq.s32.totalorder %s24, 0
      %p59 = por %p57, %p58
      %p60 = scmp.ne.s32.totalorder %s46, %s47
      %p61 = scmp.eq.s32.totalorder %s25, 1
      %p62 = por %p60, %p61
      %p64 = scmp.ne.s32.totalorder %s47, %s63
      %p65 = scmp.eq.s32.totalorder %s25, 0
      %p66 = por %p64, %p65
      %s67 = ssub.s32 %s26, %s38
      %s68 = ssub.s32 %s27, %s34
      %s69 = sor.u32 %s67, %s68
      %p70 = scmp.eq.s32.totalorder %s69, 0
      %s72 = sadd.s32 %s71, 1
      %s73 = scalar_select %p70, %s71, %s72
      %p76 = pneg %p70
      %p77 = scmp.eq.s32.totalorder %s19, 1
      %p78 = por %p76, %p77
      %p79 = scmp.ne.s32.totalorder %s71, %s74
      %p80 = scmp.eq.s32.totalorder %s19, 0
      %p81 = por %p79, %p80
      %p82 = scmp.ne.s32.totalorder %s71, %s74
      %p83 = scmp.eq.s32.totalorder %s24, 1
      %p84 = por %p82, %p83
      %p85 = scmp.ne.s32.totalorder %s74, %s75
      %p86 = scmp.eq.s32.totalorder %s24, 0
      %p87 = por %p85, %p86
      %p88 = scmp.ne.s32.totalorder %s74, %s75
      %p89 = scmp.eq.s32.totalorder %s25, 1
      %p90 = por %p88, %p89
      %p92 = scmp.ne.s32.totalorder %s75, %s91
      %p93 = scmp.eq.s32.totalorder %s25, 0
      %p94 = por %p92, %p93
      %s96 = sadd.s32 %s95, 1
      %p99 = scmp.eq.s32.totalorder %s19, 1
      %p100 = scmp.ne.s32.totalorder %s95, %s97
      %p101 = scmp.eq.s32.totalorder %s19, 0
      %p102 = por %p100, %p101
      %p103 = scmp.ne.s32.totalorder %s95, %s97
      %p104 = scmp.eq.s32.totalorder %s24, 1
      %p105 = por %p103, %p104
      %p106 = scmp.ne.s32.totalorder %s97, %s98
      %p107 = scmp.eq.s32.totalorder %s24, 0
      %p108 = por %p106, %p107
      %p109 = scmp.ne.s32.totalorder %s97, %s98
      %p110 = scmp.eq.s32.totalorder %s25, 1
      %p111 = por %p109, %p110
      %p113 = scmp.ne.s32.totalorder %s98, %s112
      %p114 = scmp.eq.s32.totalorder %s25, 0
      %p115 = por %p113, %p114
      %s117 = sadd.s32 %s116, 1
      %p120 = scmp.eq.s32.totalorder %s19, 1
      %p121 = scmp.ne.s32.totalorder %s116, %s118
      %p122 = scmp.eq.s32.totalorder %s19, 0
      %p123 = por %p121, %p122
      %p124 = scmp.ne.s32.totalorder %s116, %s118
      %p125 = scmp.eq.s32.totalorder %s24, 1
      %p126 = por %p124, %p125
      %p127 = scmp.ne.s32.totalorder %s118, %s119
      %p128 = scmp.eq.s32.totalorder %s24, 0
      %p129 = por %p127, %p128
      %p130 = scmp.ne.s32.totalorder %s118, %s119
      %p131 = scmp.eq.s32.totalorder %s25, 1
      %p132 = por %p130, %p131
      %p134 = scmp.ne.s32.totalorder %s119, %s133
      %p135 = scmp.eq.s32.totalorder %s25, 0
      %p136 = por %p134, %p135
      %s138 = sadd.s32 %s137, 1
      %p141 = scmp.eq.s32.totalorder %s19, 1
      %p142 = scmp.ne.s32.totalorder %s137, %s139
      %p143 = scmp.eq.s32.totalorder %s19, 0
      %p144 = por %p142, %p143
      %p145 = scmp.ne.s32.totalorder %s137, %s139
      %p146 = scmp.eq.s32.totalorder %s24, 1
      %p147 = por %p145, %p146
      %p148 = scmp.ne.s32.totalorder %s139, %s140
      %p149 = scmp.eq.s32.totalorder %s24, 0
      %p150 = por %p148, %p149
      %p151 = scmp.ne.s32.totalorder %s139, %s140
      %p152 = scmp.eq.s32.totalorder %s25, 1
      %p153 = por %p151, %p152
      %p155 = scmp.ne.s32.totalorder %s140, %s154
      %p156 = scmp.eq.s32.totalorder %s25, 0
      %p157 = por %p155, %p156
      %s159 = sadd.s32 %s158, 1
      %p162 = scmp.eq.s32.totalorder %s19, 1
      %p163 = scmp.ne.s32.totalorder %s158, %s160
      %p164 = scmp.eq.s32.totalorder %s19, 0
      %p165 = por %p163, %p164
      %p166 = scmp.ne.s32.totalorder %s158, %s160
      %p167 = scmp.eq.s32.totalorder %s24, 1
      %p168 = por %p166, %p167
      %p169 = scmp.ne.s32.totalorder %s160, %s161
      %p170 = scmp.eq.s32.totalorder %s24, 0
      %p171 = por %p169, %p170
      %p172 = scmp.ne.s32.totalorder %s160, %s161
      %p173 = scmp.eq.s32.totalorder %s25, 1
      %p174 = por %p172, %p173
      %p176 = scmp.ne.s32.totalorder %s161, %s175
      %p177 = scmp.eq.s32.totalorder %s25, 0
      %p178 = por %p176, %p177
      %s179 = ssub.s32 %s26, %s38
      %s180 = ssub.s32 %s27, %s34
      %s181 = sor.u32 %s179, %s180
      %p182 = scmp.eq.s32.totalorder %s181, 0
      %s184 = sadd.s32 %s183, 1
      %s185 = scalar_select %p182, %s183, %s184
      %p188 = pneg %p182
      %p189 = scmp.eq.s32.totalorder %s19, 1
      %p190 = por %p188, %p189
      %p191 = scmp.ne.s32.totalorder %s183, %s186
      %p192 = scmp.eq.s32.totalorder %s19, 0
      %p193 = por %p191, %p192
      %p194 = scmp.ne.s32.totalorder %s183, %s186
      %p195 = scmp.eq.s32.totalorder %s24, 1
      %p196 = por %p194, %p195
      %p197 = scmp.ne.s32.totalorder %s186, %s187
      %p198 = scmp.eq.s32.totalorder %s24, 0
      %p199 = por %p197, %p198
      %p200 = scmp.ne.s32.totalorder %s186, %s187
      %p201 = scmp.eq.s32.totalorder %s25, 1
      %p202 = por %p200, %p201
      %p204 = scmp.ne.s32.totalorder %s187, %s203
      %p205 = scmp.eq.s32.totalorder %s25, 0
      %p206 = por %p204, %p205
      %p207 = scmp.le.s32.totalorder 1, %s19
      %p208 = scmp.lt.s32.totalorder %s19, 3
      %p209 = pnand %p207, %p208
      %p210 = pneg %p209
      // Predicated region
      $region9: #{tpu_custom_call.1} parent=5 // pred_check
        _
      $region10: #{tpu_custom_call.1} parent=5 // pred_check_branch
        %212 = sbr.rel (%p209) target = $region12
      $region11: #{tpu_custom_call.1} parent=5 // pred_region
        %s213 = ssub.s32 %s19, 1
        // Predicated region
        $region13: #{tpu_custom_call.1} parent=11 // pred_check
          %p214 = pneg %p108
        $region14: #{tpu_custom_call.1} parent=11 // pred_check_branch
          %216 = sbr.rel (%p214) target = $region16
        $region15: #{tpu_custom_call.1} parent=11 // pred_region
          %s218 = ssub.s32 128, 128
          %219 = vsyncadd [#allocation6], %s218
          %s221 = sshll.u32 [#allocation5], 4
          %s222 = int_to_ptr.vmem [resolvable:$true] %s221
          %224 = dma.hbm_to_vmem [thread:$0]  %s2, 128, %s222, [#allocation6]
        $region16: #{tpu_custom_call.1} parent=11 // pred_fallthru
          _
        // Predicated region
        $region17: #{tpu_custom_call.1} parent=11 // pred_check
          %p225 = pneg %p129
        $region18: #{tpu_custom_call.1} parent=11 // pred_check_branch
          %227 = sbr.rel (%p225) target = $region20
        $region19: #{tpu_custom_call.1} parent=11 // pred_region
          _
        $region20: #{tpu_custom_call.1} parent=11 // pred_fallthru
          _
        // Predicated region
        $region21: #{tpu_custom_call.1} parent=11 // pred_check
          %p228 = pneg %p150
        $region22: #{tpu_custom_call.1} parent=11 // pred_check_branch
          %230 = sbr.rel (%p228) target = $region24
        $region23: #{tpu_custom_call.1} parent=11 // pred_region
          _
        $region24: #{tpu_custom_call.1} parent=11 // pred_fallthru
          _
        // Predicated region
        $region25: #{tpu_custom_call.1} parent=11 // pred_check
          %p231 = pneg %p171
        $region26: #{tpu_custom_call.1} parent=11 // pred_check_branch
          %233 = sbr.rel (%p231) target = $region28
        $region27: #{tpu_custom_call.1} parent=11 // pred_region
          _
        $region28: #{tpu_custom_call.1} parent=11 // pred_fallthru
          _
      $region12: #{tpu_custom_call.1} parent=5 // pred_fallthru
        _
      %p234 = scmp.lt.s32.totalorder %s19, 2
      // Predicated region
      $region29: #{tpu_custom_call.1} parent=5 // pred_check
        %p235 = pneg %p234
      $region30: #{tpu_custom_call.1} parent=5 // pred_check_branch
        %237 = sbr.rel (%p235) target = $region32
      $region31: #{tpu_custom_call.1} parent=5 // pred_region
        // Predicated region
        $region33: #{tpu_custom_call.1} parent=31 // pred_check
          %p238 = pneg %p53
        $region34: #{tpu_custom_call.1} parent=31 // pred_check_branch
          %240 = sbr.rel (%p238) target = $region36
        $region35: #{tpu_custom_call.1} parent=31 // pred_region
          %s241 = smul.u32 2, %s27
          %p242 = scmp.lt.s32.totalorder %s26, 1
          %s243 = scalar_select %p242, %s26, 1
          %p244 = scmp.lt.s32.totalorder %s241, 1
          %s245 = scalar_select %p244, %s241, 1
          %s246 = smul.addr %s243, 2
          %s247 = sadd.s32 %s245, %s246
          %s248 = smul.addr %s247, 4
          %s249 = scalar_lea.vmem %s0, %s248
          %s250 = smul.u32 2, %s27
        $region36: #{tpu_custom_call.1} parent=31 // pred_fallthru
          _
        // Predicated region
        $region37: #{tpu_custom_call.1} parent=31 // pred_check
          %p251 = pneg %p81
        $region38: #{tpu_custom_call.1} parent=31 // pred_check_branch
          %253 = sbr.rel (%p251) target = $region40
        $region39: #{tpu_custom_call.1} parent=31 // pred_region
          %s254 = sand.u32 %s71, 1
          %s255 = scalar_lea.sflag [#allocation3], %s254
          %s256 = sand.u32 %s71, 1
          %s257 = smul.addr %s256, 16
          %s258 = scalar_lea.vmem [#allocation2], %s257
          %s259 = smul.u32 2, %s27
          %s261 = ssub.s32 256, 256
          %262 = vsyncadd %s255, %s261
          %s263 = smul.addr %s26, 2
          %s264 = sadd.s32 %s259, %s263
          %s265 = smul.addr %s264, 128
          %s266 = scalar_lea.hbm %s1, %s265
          %s268 = sshll.u32 %s258, 4
          %s269 = int_to_ptr.vmem [resolvable:$true] %s268
          %271 = dma.hbm_to_vmem [thread:$0]  %s266, 256, %s269, %s255
        $region40: #{tpu_custom_call.1} parent=31 // pred_fallthru
          _
      $region32: #{tpu_custom_call.1} parent=5 // pred_fallthru
        _
      %p272 = scmp.le.s32.totalorder 1, %s19
      %p273 = scmp.lt.s32.totalorder %s19, 3
      %p274 = pnand %p272, %p273
      %p275 = pneg %p274
      // Predicated region
      $region41: #{tpu_custom_call.1} parent=5 // pred_check
        _
      $region42: #{tpu_custom_call.1} parent=5 // pred_check_branch
        %277 = sbr.rel (%p274) target = $region44
      $region43: #{tpu_custom_call.1} parent=5 // pred_region
        %s278 = ssub.s32 %s19, 1
        %s279 = sand.u32 %s74, 1
        %s280 = scalar_lea.sflag [#allocation3], %s279
        %s281 = sand.u32 %s74, 1
        %s282 = smul.addr %s281, 16
        %s283 = scalar_lea.vmem [#allocation2], %s282
        // Predicated region
        $region45: #{tpu_custom_call.1} parent=43 // pred_check
          %p284 = pneg %p87
        $region46: #{tpu_custom_call.1} parent=43 // pred_check_branch
          %286 = sbr.rel (%p284) target = $region48
        $region47: #{tpu_custom_call.1} parent=43 // pred_region
          %287 = dma.done %s280, 256
        $region48: #{tpu_custom_call.1} parent=43 // pred_fallthru
          _
        // Predicated region
        $region49: #{tpu_custom_call.1} parent=43 // pred_check
          %p288 = pneg %p108
        $region50: #{tpu_custom_call.1} parent=43 // pred_check_branch
          %290 = sbr.rel (%p288) target = $region52
        $region51: #{tpu_custom_call.1} parent=43 // pred_region
          %291 = dma.done [#allocation6], 128
        $region52: #{tpu_custom_call.1} parent=43 // pred_fallthru
          _
        %s292 = smul.u32 2, %s29
        %p293 = scmp.lt.s32.totalorder %s28, 1
        %s294 = scalar_select %p293, %s28, 1
        %p295 = scmp.lt.s32.totalorder %s292, 1
        %s296 = scalar_select %p295, %s292, 1
        %s297 = smul.addr %s294, 2
        %s298 = sadd.s32 %s296, %s297
        %s299 = smul.addr %s298, 4
        %s300 = scalar_lea.vmem %s0, %s299
        %p301 = pneg %p59
        %p302 = pneg %p56
        %s303 = sand.u32 %s74, 1
        %s304 = scalar_lea.sflag [#allocation3], %s303
        %s305 = sand.u32 %s74, 1
        %s306 = smul.addr %s305, 16
        %s307 = scalar_lea.vmem [#allocation2], %s306
        %p308 = pneg %p87
        %p309 = pneg %p84
        %p310 = pneg %p108
        %p311 = pneg %p105
        %p312 = pneg %p129
        %p313 = pneg %p126
        %p314 = pneg %p150
        %p315 = pneg %p147
        %p316 = pneg %p171
        %p317 = pneg %p168
        %p318 = pneg %p199
        %p319 = pneg %p196
        %s320 = sand.u32 %s186, 1
        %s321 = scalar_lea.sflag [#allocation4], %s320
        %s322 = sand.u32 %s186, 1
        %s323 = smul.addr %s322, 16
        %s324 = scalar_lea.vmem [#allocation7], %s323
        %s325 = smul.u32 2, %s29
        %p326 = scmp.lt.s32.totalorder %s28, 1
        %s327 = scalar_select %p326, %s28, 1
        %p328 = scmp.lt.s32.totalorder %s325, 1
        %s329 = scalar_select %p328, %s325, 1
        %s330 = smul.addr %s327, 2
        %s331 = sadd.s32 %s329, %s330
        %s332 = smul.addr %s331, 4
        %s333 = scalar_lea.vmem %s0, %s332
        %s334 = smul.u32 2, %s29
        %s335 = smul.u32 2, %s29
        %s336 = smul.u32 2, %s29
        %v337 = vld [vmem:[#allocation5] sm:$0xff]
        %v338 = vld [vmem:[%s333] ss:$4 sm:$0x3]
        %340 = vset.pattern.permute.xlu0 0
        %341 = vperm.xlu0 %340, %v337
        %v342 = vpop.permute.xlu0 %341
        %v345 = vlaneseq
        %v346 = vshrl.u32 %v345, 7
        %v347 = vsub.s32 0, %v346
        %v348 = vrot.slane %v338, %v347
        %v349 = vlaneseq
        %v350 = vshrl.u32 %v349, 7
        %v351 = vsub.s32 1, %v350
        %v352 = vrot.slane %v338, %v351
        %v355 = vmul.f32 %v342, %v348
        %v356 = vmul.f32 %v342, %v352
        %s357 = scalar_lea.vmem %s333, 1
        %v358 = vld [vmem:[%s357] ss:$4 sm:$0x3]
        %359 = vset.pattern.permute.xlu0 1
        %360 = vperm.xlu0 %359, %v337
        %v361 = vpop.permute.xlu0 %360
        %v364 = vlaneseq
        %v365 = vshrl.u32 %v364, 7
        %v366 = vsub.s32 0, %v365
        %v367 = vrot.slane %v358, %v366
        %v368 = vlaneseq
        %v369 = vshrl.u32 %v368, 7
        %v370 = vsub.s32 1, %v369
        %v371 = vrot.slane %v358, %v370
        %v374 = vmul.f32 %v361, %v367
        %v375 = vmul.f32 %v361, %v371
        %v376 = vadd.f32 %v355, %v374
        %v377 = vadd.f32 %v356, %v375
        %s378 = scalar_lea.vmem %s333, 2
        %v379 = vld [vmem:[%s378] ss:$4 sm:$0x3]
        %380 = vset.pattern.permute.xlu0 2
        %381 = vperm.xlu0 %380, %v337
        %v382 = vpop.permute.xlu0 %381
        %v385 = vlaneseq
        %v386 = vshrl.u32 %v385, 7
        %v387 = vsub.s32 0, %v386
        %v388 = vrot.slane %v379, %v387
        %v389 = vlaneseq
        %v390 = vshrl.u32 %v389, 7
        %v391 = vsub.s32 1, %v390
        %v392 = vrot.slane %v379, %v391
        %v395 = vmul.f32 %v382, %v388
        %v396 = vmul.f32 %v382, %v392
        %v397 = vadd.f32 %v376, %v395
        %v398 = vadd.f32 %v377, %v396
        %s399 = scalar_lea.vmem %s333, 3
        %v400 = vld [vmem:[%s399] ss:$4 sm:$0x3]
        %401 = vset.pattern.permute.xlu0 3
        %402 = vperm.xlu0 %401, %v337
        %v403 = vpop.permute.xlu0 %402
        %v406 = vlaneseq
        %v407 = vshrl.u32 %v406, 7
        %v408 = vsub.s32 0, %v407
        %v409 = vrot.slane %v400, %v408
        %v410 = vlaneseq
        %v411 = vshrl.u32 %v410, 7
        %v412 = vsub.s32 1, %v411
        %v413 = vrot.slane %v400, %v412
        %v416 = vmul.f32 %v403, %v409
        %v417 = vmul.f32 %v403, %v413
        %v418 = vadd.f32 %v397, %v416
        %v419 = vadd.f32 %v398, %v417
        %v420 = vld [vmem:[%s283] ss:$8 sm:$0x3]
        %421 = vset.pattern.permute.xlu0 4
        %422 = vperm.xlu0 %421, %v337
        %v423 = vpop.permute.xlu0 %422
        %v426 = vlaneseq
        %v427 = vshrl.u32 %v426, 7
        %v428 = vsub.s32 0, %v427
        %v429 = vrot.slane %v420, %v428
        %v430 = vlaneseq
        %v431 = vshrl.u32 %v430, 7
        %v432 = vsub.s32 1, %v431
        %v433 = vrot.slane %v420, %v432
        %v436 = vmul.f32 %v423, %v429
        %v437 = vmul.f32 %v423, %v433
        %v438 = vadd.f32 %v418, %v436
        %v439 = vadd.f32 %v419, %v437
        %s440 = scalar_lea.vmem %s283, 1 [#allocation2]
        %v441 = vld [vmem:[%s440] ss:$8 sm:$0x3]
        %442 = vset.pattern.permute.xlu0 5
        %443 = vperm.xlu0 %442, %v337
        %v444 = vpop.permute.xlu0 %443
        %v447 = vlaneseq
        %v448 = vshrl.u32 %v447, 7
        %v449 = vsub.s32 0, %v448
        %v450 = vrot.slane %v441, %v449
        %v451 = vlaneseq
        %v452 = vshrl.u32 %v451, 7
        %v453 = vsub.s32 1, %v452
        %v454 = vrot.slane %v441, %v453
        %v457 = vmul.f32 %v444, %v450
        %v458 = vmul.f32 %v444, %v454
        %v459 = vadd.f32 %v438, %v457
        %v460 = vadd.f32 %v439, %v458
        %s461 = scalar_lea.vmem %s283, 2 [#allocation2]
        %v462 = vld [vmem:[%s461] ss:$8 sm:$0x3]
        %463 = vset.pattern.permute.xlu0 6
        %464 = vperm.xlu0 %463, %v337
        %v465 = vpop.permute.xlu0 %464
        %v468 = vlaneseq
        %v469 = vshrl.u32 %v468, 7
        %v470 = vsub.s32 0, %v469
        %v471 = vrot.slane %v462, %v470
        %v472 = vlaneseq
        %v473 = vshrl.u32 %v472, 7
        %v474 = vsub.s32 1, %v473
        %v475 = vrot.slane %v462, %v474
        %v478 = vmul.f32 %v465, %v471
        %v479 = vmul.f32 %v465, %v475
        %v480 = vadd.f32 %v459, %v478
        %v481 = vadd.f32 %v460, %v479
        %s482 = scalar_lea.vmem %s283, 3 [#allocation2]
        %v483 = vld [vmem:[%s482] ss:$8 sm:$0x3]
        %484 = vset.pattern.permute.xlu0 7
        %485 = vperm.xlu0 %484, %v337
        %v486 = vpop.permute.xlu0 %485
        %v489 = vlaneseq
        %v490 = vshrl.u32 %v489, 7
        %v491 = vsub.s32 0, %v490
        %v492 = vrot.slane %v483, %v491
        %v493 = vlaneseq
        %v494 = vshrl.u32 %v493, 7
        %v495 = vsub.s32 1, %v494
        %v496 = vrot.slane %v483, %v495
        %v499 = vmul.f32 %v486, %v492
        %v500 = vmul.f32 %v486, %v496
        %v501 = vadd.f32 %v480, %v499
        %v502 = vadd.f32 %v481, %v500
        %s503 = scalar_lea.vmem %s283, 4 [#allocation2]
        %v504 = vld [vmem:[%s503] ss:$8 sm:$0x3]
        %505 = vset.pattern.permute.xlu0 8
        %506 = vperm.xlu0 %505, %v337
        %v507 = vpop.permute.xlu0 %506
        %v510 = vlaneseq
        %v511 = vshrl.u32 %v510, 7
        %v512 = vsub.s32 0, %v511
        %v513 = vrot.slane %v504, %v512
        %v514 = vlaneseq
        %v515 = vshrl.u32 %v514, 7
        %v516 = vsub.s32 1, %v515
        %v517 = vrot.slane %v504, %v516
        %v520 = vmul.f32 %v507, %v513
        %v521 = vmul.f32 %v507, %v517
        %v522 = vadd.f32 %v501, %v520
        %v523 = vadd.f32 %v502, %v521
        %s524 = scalar_lea.vmem %s283, 5 [#allocation2]
        %v525 = vld [vmem:[%s524] ss:$8 sm:$0x3]
        %526 = vset.pattern.permute.xlu0 9
        %527 = vperm.xlu0 %526, %v337
        %v528 = vpop.permute.xlu0 %527
        %v531 = vlaneseq
        %v532 = vshrl.u32 %v531, 7
        %v533 = vsub.s32 0, %v532
        %v534 = vrot.slane %v525, %v533
        %v535 = vlaneseq
        %v536 = vshrl.u32 %v535, 7
        %v537 = vsub.s32 1, %v536
        %v538 = vrot.slane %v525, %v537
        %v541 = vmul.f32 %v528, %v534
        %v542 = vmul.f32 %v528, %v538
        %v543 = vadd.f32 %v522, %v541
        %v544 = vadd.f32 %v523, %v542
        %s545 = scalar_lea.vmem %s283, 6 [#allocation2]
        %v546 = vld [vmem:[%s545] ss:$8 sm:$0x3]
        %547 = vset.pattern.permute.xlu0 10
        %548 = vperm.xlu0 %547, %v337
        %v549 = vpop.permute.xlu0 %548
        %v552 = vlaneseq
        %v553 = vshrl.u32 %v552, 7
        %v554 = vsub.s32 0, %v553
        %v555 = vrot.slane %v546, %v554
        %v556 = vlaneseq
        %v557 = vshrl.u32 %v556, 7
        %v558 = vsub.s32 1, %v557
        %v559 = vrot.slane %v546, %v558
        %v562 = vmul.f32 %v549, %v555
        %v563 = vmul.f32 %v549, %v559
        %v564 = vadd.f32 %v543, %v562
        %v565 = vadd.f32 %v544, %v563
        %s566 = scalar_lea.vmem %s283, 7 [#allocation2]
        %v567 = vld [vmem:[%s566] ss:$8 sm:$0x3]
        %568 = vset.pattern.permute.xlu0 11
        %569 = vperm.xlu0 %568, %v337
        %v570 = vpop.permute.xlu0 %569
        %v573 = vlaneseq
        %v574 = vshrl.u32 %v573, 7
        %v575 = vsub.s32 0, %v574
        %v576 = vrot.slane %v567, %v575
        %v577 = vlaneseq
        %v578 = vshrl.u32 %v577, 7
        %v579 = vsub.s32 1, %v578
        %v580 = vrot.slane %v567, %v579
        %v583 = vmul.f32 %v570, %v576
        %v584 = vmul.f32 %v570, %v580
        %v585 = vadd.f32 %v564, %v583
        %v586 = vadd.f32 %v565, %v584
        %v587 = vld [vmem:[%s3] sm:$0xff]
        %589 = vset.pattern.permute.xlu0 0
        %590 = vperm.xlu0 %589, %v587
        %v591 = vpop.permute.xlu0 %590
        %v593 = vadd.f32 %v585, %v591
        %v594 = vadd.f32 %v586, %v591
        %v595 = vmax.f32 %v593, 0.0
        %v596 = vmax.f32 %v594, 0.0
        %v597 = vld [vmem:[%s4] sm:$0xff]
        %599 = vset.pattern.permute.xlu0 0
        %600 = vperm.xlu0 %599, %v597
        %v601 = vpop.permute.xlu0 %600
        %v603 = vlaneseq
        %v604 = vshrl.u32 %v603, 7
        %v605 = vsub.s32 0, %v604
        %v606 = vrot.slane %v595, %v605
        %v607 = vlaneseq
        %v608 = vshrl.u32 %v607, 7
        %v609 = vsub.s32 0, %v608
        %v610 = vrot.slane %v596, %v609
        %v611 = vmul.f32 %v601, %v606
        %v612 = vmul.f32 %v601, %v610
        %613 = vset.pattern.permute.xlu0 1
        %614 = vperm.xlu0 %613, %v597
        %v615 = vpop.permute.xlu0 %614
        %v617 = vlaneseq
        %v618 = vshrl.u32 %v617, 7
        %v619 = vsub.s32 1, %v618
        %v620 = vrot.slane %v595, %v619
        %v621 = vlaneseq
        %v622 = vshrl.u32 %v621, 7
        %v623 = vsub.s32 1, %v622
        %v624 = vrot.slane %v596, %v623
        %v625 = vmul.f32 %v615, %v620
        %v626 = vmul.f32 %v615, %v624
        %v627 = vadd.f32 %v611, %v625
        %v628 = vadd.f32 %v612, %v626
        %629 = vset.pattern.permute.xlu0 2
        %630 = vperm.xlu0 %629, %v597
        %v631 = vpop.permute.xlu0 %630
        %v633 = vlaneseq
        %v634 = vshrl.u32 %v633, 7
        %v635 = vsub.s32 2, %v634
        %v636 = vrot.slane %v595, %v635
        %v637 = vlaneseq
        %v638 = vshrl.u32 %v637, 7
        %v639 = vsub.s32 2, %v638
        %v640 = vrot.slane %v596, %v639
        %v641 = vmul.f32 %v631, %v636
        %v642 = vmul.f32 %v631, %v640
        %v643 = vadd.f32 %v627, %v641
        %v644 = vadd.f32 %v628, %v642
        %645 = vset.pattern.permute.xlu0 3
        %646 = vperm.xlu0 %645, %v597
        %v647 = vpop.permute.xlu0 %646
        %v649 = vlaneseq
        %v650 = vshrl.u32 %v649, 7
        %v651 = vsub.s32 3, %v650
        %v652 = vrot.slane %v595, %v651
        %v653 = vlaneseq
        %v654 = vshrl.u32 %v653, 7
        %v655 = vsub.s32 3, %v654
        %v656 = vrot.slane %v596, %v655
        %v657 = vmul.f32 %v647, %v652
        %v658 = vmul.f32 %v647, %v656
        %v659 = vadd.f32 %v643, %v657
        %v660 = vadd.f32 %v644, %v658
        %661 = vset.pattern.permute.xlu0 4
        %662 = vperm.xlu0 %661, %v597
        %v663 = vpop.permute.xlu0 %662
        %v665 = vlaneseq
        %v666 = vshrl.u32 %v665, 7
        %v667 = vsub.s32 4, %v666
        %v668 = vrot.slane %v595, %v667
        %v669 = vlaneseq
        %v670 = vshrl.u32 %v669, 7
        %v671 = vsub.s32 4, %v670
        %v672 = vrot.slane %v596, %v671
        %v673 = vmul.f32 %v663, %v668
        %v674 = vmul.f32 %v663, %v672
        %v675 = vadd.f32 %v659, %v673
        %v676 = vadd.f32 %v660, %v674
        %677 = vset.pattern.permute.xlu0 5
        %678 = vperm.xlu0 %677, %v597
        %v679 = vpop.permute.xlu0 %678
        %v681 = vlaneseq
        %v682 = vshrl.u32 %v681, 7
        %v683 = vsub.s32 5, %v682
        %v684 = vrot.slane %v595, %v683
        %v685 = vlaneseq
        %v686 = vshrl.u32 %v685, 7
        %v687 = vsub.s32 5, %v686
        %v688 = vrot.slane %v596, %v687
        %v689 = vmul.f32 %v679, %v684
        %v690 = vmul.f32 %v679, %v688
        %v691 = vadd.f32 %v675, %v689
        %v692 = vadd.f32 %v676, %v690
        %693 = vset.pattern.permute.xlu0 6
        %694 = vperm.xlu0 %693, %v597
        %v695 = vpop.permute.xlu0 %694
        %v697 = vlaneseq
        %v698 = vshrl.u32 %v697, 7
        %v699 = vsub.s32 6, %v698
        %v700 = vrot.slane %v595, %v699
        %v701 = vlaneseq
        %v702 = vshrl.u32 %v701, 7
        %v703 = vsub.s32 6, %v702
        %v704 = vrot.slane %v596, %v703
        %v705 = vmul.f32 %v695, %v700
        %v706 = vmul.f32 %v695, %v704
        %v707 = vadd.f32 %v691, %v705
        %v708 = vadd.f32 %v692, %v706
        %709 = vset.pattern.permute.xlu0 7
        %710 = vperm.xlu0 %709, %v597
        %v711 = vpop.permute.xlu0 %710
        %v713 = vlaneseq
        %v714 = vshrl.u32 %v713, 7
        %v715 = vsub.s32 7, %v714
        %v716 = vrot.slane %v595, %v715
        %v717 = vlaneseq
        %v718 = vshrl.u32 %v717, 7
        %v719 = vsub.s32 7, %v718
        %v720 = vrot.slane %v596, %v719
        %v721 = vmul.f32 %v711, %v716
        %v722 = vmul.f32 %v711, %v720
        %v723 = vadd.f32 %v707, %v721
        %v724 = vadd.f32 %v708, %v722
        %v725 = vld [vmem:[%s5] sm:$0xff]
        %727 = vset.pattern.permute.xlu0 0
        %728 = vperm.xlu0 %727, %v725
        %v729 = vpop.permute.xlu0 %728
        %v731 = vadd.f32 %v723, %v729
        %v732 = vadd.f32 %v724, %v729
        %v733 = vmul.f32 %v731, 0.5
        %v734 = vmul.f32 %v732, 0.5
        %v735 = vtanh.pop %v733
        %v736 = vtanh.pop %v734
        %v737 = vmul.f32 %v735, 0.5
        %v738 = vmul.f32 %v736, 0.5
        %v739 = vadd.f32 %v737, 0.5
        %v740 = vadd.f32 %v738, 0.5
        %741 = vst [vmem:[%s324] sm:$0xff] %v739
        %742 = vst [vmem:[%s324 + $0x8] sm:$0xff] %v740
        %s743 = sand.u32 %s186, 1
        %s744 = scalar_lea.sflag [#allocation4], %s743
        %s745 = sand.u32 %s186, 1
        %s746 = smul.addr %s745, 16
        %s747 = scalar_lea.vmem [#allocation7], %s746
        // Predicated region
        $region53: #{tpu_custom_call.1} parent=43 // pred_check
          %p748 = pneg %p196
        $region54: #{tpu_custom_call.1} parent=43 // pred_check_branch
          %750 = sbr.rel (%p748) target = $region56
        $region55: #{tpu_custom_call.1} parent=43 // pred_region
          %s751 = smul.u32 2, %s29
          %s753 = ssub.s32 256, 256
          %754 = vsyncadd %s744, %s753
          %s755 = smul.addr %s28, 2
          %s756 = sadd.s32 %s751, %s755
          %s757 = smul.addr %s756, 128
          %s758 = scalar_lea.hbm %s6, %s757
          %s760 = sshll.u32 %s747, 4
          %s761 = int_to_ptr.vmem [resolvable:$true] %s760
          %763 = dma.vmem_to_hbm [thread:$0]  %s761, 256, %s758, %s744
        $region56: #{tpu_custom_call.1} parent=43 // pred_fallthru
          _
      $region44: #{tpu_custom_call.1} parent=5 // pred_fallthru
        _
      %p764 = scmp.le.s32.totalorder 2, %s19
      // Predicated region
      $region57: #{tpu_custom_call.1} parent=5 // pred_check
        %p765 = pneg %p764
      $region58: #{tpu_custom_call.1} parent=5 // pred_check_branch
        %767 = sbr.rel (%p765) target = $region60
      $region59: #{tpu_custom_call.1} parent=5 // pred_region
        %s768 = ssub.s32 %s19, 2
        // Predicated region
        $region61: #{tpu_custom_call.1} parent=59 // pred_check
          %p769 = pneg %p202
        $region62: #{tpu_custom_call.1} parent=59 // pred_check_branch
          %771 = sbr.rel (%p769) target = $region64
        $region63: #{tpu_custom_call.1} parent=59 // pred_region
          %s772 = sand.u32 %s187, 1
          %s773 = scalar_lea.sflag [#allocation4], %s772
          %s774 = sand.u32 %s187, 1
          %s775 = smul.addr %s774, 16
          %s776 = scalar_lea.vmem [#allocation7], %s775
          %777 = dma.done %s773, 256
        $region64: #{tpu_custom_call.1} parent=59 // pred_fallthru
          _
      $region60: #{tpu_custom_call.1} parent=5 // pred_fallthru
        _
    $region6: #{tpu_custom_call.1} parent=1 // loop_footer
      %s23 = sadd.s32 1, %s19
    $region7: #{tpu_custom_call.1} parent=1 // loop_footer_branch
      %18 = sbr.rel target = $region3
    $region8: #{tpu_custom_call.1} parent=1 // loop_exit
      _
    %778 = vsyncpa [#allocation3], 1
    %s779 = scalar_lea.sflag [#allocation3], 1
    %780 = vsyncpa %s779, 1
    %781 = vsyncpa [#allocation6], 1
    %782 = vsyncpa [#allocation4], 1
    %s783 = scalar_lea.sflag [#allocation4], 1
    %784 = vsyncpa %s783, 1

</llo_original>
